<compile_context>
chip_gen: v7x
topology: tpu7x:2x2x1
jax: 0.10.0
libtpu: 0.0.40
codegen_flags: <defaults>
</compile_context>

<pallas_src>
import functools

import jax
import jax.numpy as jnp
from jax import lax
from jax.experimental import pallas as pl
from jax.experimental.pallas import tpu as pltpu

_C1 = 0.01 ** 2
_C2 = 0.03 ** 2


# ----------------------------- Pallas kernel ------------------------------

def _ssim_kernel(x1_ref, x2_ref, kt_ref, o_ref, acc_ref, *, tb, n_inner,
                 b_valid):
    i = pl.program_id(1)                      # inner ("arbitrary") reduction axis

    @pl.when(i == 0)
    def _init():
        acc_ref[...] = jnp.zeros_like(acc_ref)

    x1 = x1_ref[...]                          # (tb, P) f32
    x2 = x2_ref[...]                          # (tb, P) f32
    kt = kt_ref[...]                          # (P, P)  f32, VMEM-resident

    # Five Gaussian blurs fused into ONE lane-dense MXU matmul (shared RHS).
    lhs = jnp.concatenate([x1, x2, x1 * x1, x2 * x2, x1 * x2], axis=0)
    blur = jnp.dot(lhs, kt, preferred_element_type=jnp.float32)   # (5*tb, P)
    mu1 = blur[0 * tb:1 * tb]
    mu2 = blur[1 * tb:2 * tb]
    e11 = blur[2 * tb:3 * tb]
    e22 = blur[3 * tb:4 * tb]
    e12 = blur[4 * tb:5 * tb]

    mu1_sq = mu1 * mu1
    mu2_sq = mu2 * mu2
    mu1_mu2 = mu1 * mu2
    sigma1_sq = e11 - mu1_sq
    sigma2_sq = e22 - mu2_sq
    sigma12 = e12 - mu1_mu2

    num = (2.0 * mu1_mu2 + _C1) * (2.0 * sigma12 + _C2)
    den = (mu1_sq + mu2_sq + _C1) * (sigma1_sq + sigma2_sq + _C2)
    # approx=True would push this fully onto the EUP, but risks the 1e-4
    # reference tolerance (values ~1); keep the exact reciprocal.
    ssim_map = num * pl.reciprocal(den, approx=False)

    # Mask rows that are zero-padding of the (N*C) plane axis (an all-zero
    # plane would otherwise contribute SSIM == 1).  b_valid is compile-time.
    block_start = (pl.program_id(0) * n_inner + i) * tb
    row = lax.broadcasted_iota(jnp.int32, (tb, 1), 0) + block_start
    acc_ref[...] += jnp.where(row < b_valid, ssim_map, 0.0)

    # Finalize once per outer chunk: single cross-lane/sublane reduce and one
    # lane-dense store of the per-chunk partial sum.
    @pl.when(i == n_inner - 1)
    def _finalize():
        o_ref[...] = jnp.broadcast_to(jnp.sum(acc_ref[...]), o_ref.shape)


# -------------------------- trace-time constants ---------------------------

def _gaussian_1d(window_size, sigma):
    x = jnp.arange(window_size, dtype=jnp.float32) - float(window_size // 2)
    g = jnp.exp(-(x ** 2) / (2.0 * sigma ** 2))
    return g / jnp.sum(g)


def _conv1d_matrix(size, g, pad):
    # A[o, i] = g[i - o + pad] for valid taps, else 0  (zero-padded conv).
    o = jnp.arange(size)[:, None]
    i = jnp.arange(size)[None, :]
    idx = i - o + pad
    valid = (idx >= 0) & (idx < g.shape[0])
    return jnp.where(valid, g[jnp.clip(idx, 0, g.shape[0] - 1)], 0.0)


def _round_up(x, m):
    return (x + m - 1) // m * m


# ------------------------------ public wrapper ------------------------------

def ssim_pallas(img1, img2, window_size=11, sigma=1.5):
    assert img1.shape == img2.shape, (img1.shape, img2.shape)
    n, c, h, w = img1.shape
    p = h * w
    b = n * c
    pad = window_size // 2

    # Dense 2-D Gaussian-conv matrix (kron of the two 1-D conv matrices):
    # blur_flat = X_flat @ K^T.  Only viable while (H*W)^2 * 4B stays small;
    # see separable-blur TODO at the top of the file.
    assert p * p * 4 <= 8 * 1024 * 1024, (
        "dense conv matrix too large for VMEM; implement the separable blur")
    g = _gaussian_1d(window_size, sigma)
    a_h = _conv1d_matrix(h, g, pad)
    a_w = _conv1d_matrix(w, g, pad)
    kt = (a_h[:, None, :, None] * a_w[None, :, None, :]).reshape(p, p).T
    kt = kt.astype(jnp.float32)

    x1 = img1.astype(jnp.float32).reshape(b, p)
    x2 = img2.astype(jnp.float32).reshape(b, p)

    # Plane tile: up to 256 rows (full MXU M-occupancy, amortizes the fixed
    # per-grid-step overhead) but never larger than the padded batch.
    tb = min(256, _round_up(b, 8))
    n_blocks = -(-b // tb)                    # cdiv
    bp = n_blocks * tb
    if bp != b:
        x1 = jnp.pad(x1, ((0, bp - b), (0, 0)))
        x2 = jnp.pad(x2, ((0, bp - b), (0, 0)))

    # 2-D grid: outer "parallel" chunk axis (feeds both TensorCores on v7x,
    # each chunk owns its own partial-sum output block -> no race), inner
    # "arbitrary" reduction axis accumulating into the VMEM scratch.
    n_outer = 2 if (n_blocks % 2 == 0) else 1
    n_inner = n_blocks // n_outer

    kernel = functools.partial(_ssim_kernel, tb=tb, n_inner=n_inner, b_valid=b)

    partial_sums = pl.pallas_call(
        kernel,
        out_shape=jax.ShapeDtypeStruct((n_outer, 8, 128), jnp.float32),
        grid=(n_outer, n_inner),
        in_specs=[
            pl.BlockSpec((tb, p), lambda o, i: (o * n_inner + i, 0)),   # img1
            pl.BlockSpec((tb, p), lambda o, i: (o * n_inner + i, 0)),   # img2
            # Grid-invariant weight: constant index_map => DMA'd once, stays
            # VMEM-resident for the whole grid (no per-step re-fetch).
            pl.BlockSpec((p, p), lambda o, i: (0, 0)),
        ],
        out_specs=pl.BlockSpec((1, 8, 128), lambda o, i: (o, 0, 0)),
        scratch_shapes=[pltpu.VMEM((tb, p), jnp.float32)],
        compiler_params=pltpu.CompilerParams(
            dimension_semantics=("parallel", "arbitrary"),
            vmem_limit_bytes=32 * 1024 * 1024),
    )(x1, x2, kt)

    # size_average=True path (module default); mean = sum(partials)/(N*C*H*W).
    return jnp.sum(partial_sums[:, 0, 0]) * (1.0 / float(b * p))


# ------------------------ pure-JAX reference (check) ------------------------

def _ssim_reference(img1, img2, window_size=11, sigma=1.5):
    n, c, h, w = img1.shape
    pad = window_size // 2
    g = _gaussian_1d(window_size, sigma)
    w2d = jnp.outer(g, g)
    win = jnp.tile(w2d[None, None], (c, 1, 1, 1))

    def blur(x):
        return jax.lax.conv_general_dilated(
            x, win, (1, 1), [(pad, pad), (pad, pad)],
            dimension_numbers=("NCHW", "OIHW", "NCHW"),
            feature_group_count=c,
            precision=jax.lax.Precision.HIGHEST)

    img1 = img1.astype(jnp.float32)
    img2 = img2.astype(jnp.float32)
    mu1, mu2 = blur(img1), blur(img2)
    mu1_sq, mu2_sq, mu1_mu2 = mu1 * mu1, mu2 * mu2, mu1 * mu2
    s1 = blur(img1 * img1) - mu1_sq
    s2 = blur(img2 * img2) - mu2_sq
    s12 = blur(img1 * img2) - mu1_mu2
    m = ((2 * mu1_mu2 + _C1) * (2 * s12 + _C2)) / \
        ((mu1_sq + mu2_sq + _C1) * (s1 + s2 + _C2))
    return jnp.mean(m)


# ---------------------------------- main ------------------------------------

if __name__ == "__main__":
    key = jax.random.PRNGKey(0)
    k1, k2, k3, k4 = jax.random.split(key, 4)

    ssim_fn = jax.jit(ssim_pallas)

    # Small shape: exercises the single-block path and row masking (N*C=6 < 8).
    img1 = jax.random.uniform(k1, (2, 3, 16, 16), jnp.float32)
    img2 = jnp.clip(
        img1 + 0.1 * jax.random.normal(k2, (2, 3, 16, 16), jnp.float32),
        0.0, 1.0)

    out = jax.block_until_ready(ssim_fn(img1, img2))
    ref = _ssim_reference(img1, img2)
    assert out.shape == (), out.shape
    assert bool(jnp.isfinite(out))
    assert abs(float(out) - float(ref)) < 1e-4, (float(out), float(ref))

    same = jax.block_until_ready(ssim_fn(img1, img1))
    assert abs(float(same) - 1.0) < 1e-3, float(same)

    # Larger plane count: exercises the full 256-row tile, the multi-step
    # inner reduction and last-block masking (N*C = 600 -> 3 blocks of 256).
    big1 = jax.random.uniform(k3, (3, 200, 16, 16), jnp.float32)
    big2 = jnp.clip(
        big1 + 0.05 * jax.random.normal(k4, (3, 200, 16, 16), jnp.float32),
        0.0, 1.0)
    out_big = jax.block_until_ready(ssim_fn(big1, big2))
    ref_big = _ssim_reference(big1, big2)
    assert abs(float(out_big) - float(ref_big)) < 2e-4, (
        float(out_big), float(ref_big))

    print("KERNEL_OK")
</pallas_src>

<mosaic_0001>
module attributes {stable_mosaic.version = 11 : i64} {
  func.func @_ssim_kernel(%arg0: i32, %arg1: i32, %arg2: memref<8x256xf32, #tpu.memory_space<vmem>>, %arg3: memref<8x256xf32, #tpu.memory_space<vmem>>, %arg4: memref<256x256xf32, #tpu.memory_space<vmem>>, %arg5: memref<1x8x128xf32, #tpu.memory_space<vmem>>, %arg6: memref<8x256xf32, #tpu.memory_space<vmem>>) attributes {dimension_semantics = [#tpu.dimension_semantics<parallel>, #tpu.dimension_semantics<arbitrary>], iteration_bounds = array<i64: 1, 1>, scalar_prefetch = 0 : i64, scratch_operands = 1 : i64, tpu.core_type = #tpu.core_type<tc>, window_params = [{transform_indices = @transform_0, window_bounds = array<i64: 8, 256>}, {transform_indices = @transform_1, window_bounds = array<i64: 8, 256>}, {pipeline_mode = #tpu.pipeline_mode<synchronous>, transform_indices = @transform_2, window_bounds = array<i64: 256, 256>}, {transform_indices = @transform_3, window_bounds = array<i64: 1, 8, 128>}]} {
    %c0_i32 = arith.constant 0 : i32
    %0 = arith.cmpi eq, %arg1, %c0_i32 : i32
    %1 = arith.extui %0 : i1 to i32
    %c0_i32_0 = arith.constant 0 : i32
    %2 = arith.cmpi ne, %1, %c0_i32_0 : i32
    scf.if %2 {
      %cst_19 = arith.constant 0.000000e+00 : f32
      %58 = vector.broadcast %cst_19 : f32 to vector<8x256xf32>
      %c0_20 = arith.constant 0 : index
      %c0_21 = arith.constant 0 : index
      %59 = vector.load %arg6[%c0_20, %c0_21] : memref<8x256xf32, #tpu.memory_space<vmem>>, vector<8x256xf32>
      tpu.vector_store %arg6[%c0_20, %c0_21], %58 {strides = array<i32>} : memref<8x256xf32, #tpu.memory_space<vmem>>, vector<8x256xf32>,
    } else {
    }
    %c0 = arith.constant 0 : index
    %c0_1 = arith.constant 0 : index
    %3 = vector.load %arg2[%c0, %c0_1] : memref<8x256xf32, #tpu.memory_space<vmem>>, vector<8x256xf32>
    %c0_2 = arith.constant 0 : index
    %c0_3 = arith.constant 0 : index
    %4 = vector.load %arg3[%c0_2, %c0_3] : memref<8x256xf32, #tpu.memory_space<vmem>>, vector<8x256xf32>
    %c0_4 = arith.constant 0 : index
    %c0_5 = arith.constant 0 : index
    %5 = vector.load %arg4[%c0_4, %c0_5] : memref<256x256xf32, #tpu.memory_space<vmem>>, vector<256x256xf32>
    %6 = arith.mulf %3, %3 : vector<8x256xf32>
    %7 = arith.mulf %4, %4 : vector<8x256xf32>
    %8 = arith.mulf %3, %4 : vector<8x256xf32>
    %9 = tpu.concatenate %3, %4, %6, %7, %8 in 0 : vector<8x256xf32>, vector<8x256xf32>, vector<8x256xf32>, vector<8x256xf32>, vector<8x256xf32> -> vector<40x256xf32>
    %cst = arith.constant dense<0.000000e+00> : vector<40x256xf32>
    %10 = tpu.matmul %9, %5, %cst {dimension_numbers = #tpu.dot_dimension_numbers<[1], [0], [0], [1], [0, 0, 1, 1], [], []>} : vector<40x256xf32>, vector<256x256xf32>, vector<40x256xf32> -> vector<40x256xf32>
    %11 = vector.extract_strided_slice %10 {offsets = [0, 0], sizes = [8, 256], strides = [1, 1]} : vector<40x256xf32> to vector<8x256xf32>
    %12 = vector.extract_strided_slice %10 {offsets = [8, 0], sizes = [8, 256], strides = [1, 1]} : vector<40x256xf32> to vector<8x256xf32>
    %13 = vector.extract_strided_slice %10 {offsets = [16, 0], sizes = [8, 256], strides = [1, 1]} : vector<40x256xf32> to vector<8x256xf32>
    %14 = vector.extract_strided_slice %10 {offsets = [24, 0], sizes = [8, 256], strides = [1, 1]} : vector<40x256xf32> to vector<8x256xf32>
    %15 = vector.extract_strided_slice %10 {offsets = [32, 0], sizes = [8, 256], strides = [1, 1]} : vector<40x256xf32> to vector<8x256xf32>
    %16 = arith.mulf %11, %11 : vector<8x256xf32>
    %17 = arith.mulf %12, %12 : vector<8x256xf32>
    %18 = arith.mulf %11, %12 : vector<8x256xf32>
    %19 = arith.subf %13, %16 : vector<8x256xf32>
    %20 = arith.subf %14, %17 : vector<8x256xf32>
    %21 = arith.subf %15, %18 : vector<8x256xf32>
    %cst_6 = arith.constant 2.000000e+00 : f32
    %22 = vector.broadcast %cst_6 : f32 to vector<8x256xf32>
    %23 = arith.mulf %22, %18 : vector<8x256xf32>
    %cst_7 = arith.constant 9.99999974E-5 : f32
    %24 = vector.broadcast %cst_7 : f32 to vector<8x256xf32>
    %25 = arith.addf %23, %24 : vector<8x256xf32>
    %cst_8 = arith.constant 2.000000e+00 : f32
    %26 = vector.broadcast %cst_8 : f32 to vector<8x256xf32>
    %27 = arith.mulf %26, %21 : vector<8x256xf32>
    %cst_9 = arith.constant 8.99999984E-4 : f32
    %28 = vector.broadcast %cst_9 : f32 to vector<8x256xf32>
    %29 = arith.addf %27, %28 : vector<8x256xf32>
    %30 = arith.mulf %25, %29 : vector<8x256xf32>
    %31 = arith.addf %16, %17 : vector<8x256xf32>
    %cst_10 = arith.constant 9.99999974E-5 : f32
    %32 = vector.broadcast %cst_10 : f32 to vector<8x256xf32>
    %33 = arith.addf %31, %32 : vector<8x256xf32>
    %34 = arith.addf %19, %20 : vector<8x256xf32>
    %cst_11 = arith.constant 8.99999984E-4 : f32
    %35 = vector.broadcast %cst_11 : f32 to vector<8x256xf32>
    %36 = arith.addf %34, %35 : vector<8x256xf32>
    %37 = arith.mulf %33, %36 : vector<8x256xf32>
    %38 = tpu.reciprocal %37 : vector<8x256xf32> -> vector<8x256xf32>
    %39 = arith.mulf %30, %38 : vector<8x256xf32>
    %c1_i32 = arith.constant 1 : i32
    %40 = arith.muli %arg0, %c1_i32 : i32
    %41 = arith.addi %40, %arg1 : i32
    %c8_i32 = arith.constant 8 : i32
    %42 = arith.muli %41, %c8_i32 : i32
    %43 = tpu.iota {dimensions = array<i32: 0>} : vector<8x1xi32>
    %44 = vector.broadcast %42 : i32 to vector<8x1xi32>
    %45 = arith.addi %43, %44 : vector<8x1xi32>
    %c0_12 = arith.constant 0 : index
    %c0_13 = arith.constant 0 : index
    %46 = vector.load %arg6[%c0_12, %c0_13] : memref<8x256xf32, #tpu.memory_space<vmem>>, vector<8x256xf32>
    %c6_i32 = arith.constant 6 : i32
    %47 = vector.broadcast %c6_i32 : i32 to vector<8x1xi32>
    %48 = arith.cmpi slt, %45, %47 : vector<8x1xi32>
    %cst_14 = arith.constant 0.000000e+00 : f32
    %49 = vector.shape_cast %48 : vector<8x1xi1> to vector<8x1xi1>
    %50 = vector.broadcast %49 : vector<8x1xi1> to vector<8x256xi1>
    %51 = vector.broadcast %cst_14 : f32 to vector<8x256xf32>
    %52 = arith.select %50, %39, %51 : vector<8x256xi1>, vector<8x256xf32>
    %53 = arith.addf %46, %52 : vector<8x256xf32>
    %c0_15 = arith.constant 0 : index
    %c0_16 = arith.constant 0 : index
    %54 = vector.load %arg6[%c0_15, %c0_16] : memref<8x256xf32, #tpu.memory_space<vmem>>, vector<8x256xf32>
    tpu.vector_store %arg6[%c0_15, %c0_16], %53 {strides = array<i32>} : memref<8x256xf32, #tpu.memory_space<vmem>>, vector<8x256xf32>,
    %c0_i32_17 = arith.constant 0 : i32
    %55 = arith.cmpi eq, %arg1, %c0_i32_17 : i32
    %56 = arith.extui %55 : i1 to i32
    %c0_i32_18 = arith.constant 0 : i32
    %57 = arith.cmpi ne, %56, %c0_i32_18 : i32
    scf.if %57 {
      %c0_19 = arith.constant 0 : index
      %c0_20 = arith.constant 0 : index
      %58 = vector.load %arg6[%c0_19, %c0_20] : memref<8x256xf32, #tpu.memory_space<vmem>>, vector<8x256xf32>
      %59 = vector.shape_cast %58 : vector<8x256xf32> to vector<1x8x256xf32>
      %cst_21 = arith.constant dense<0.000000e+00> : vector<1xf32>
      %60 = vector.multi_reduction <add>, %59, %cst_21 [1, 2] : vector<1x8x256xf32> to vector<1xf32>
      %61 = vector.shape_cast %60 : vector<1xf32> to vector<1x1x1xf32>
      %62 = vector.extract %61[0, 0, 0] : f32 from vector<1x1x1xf32>
      %63 = vector.broadcast %62 : f32 to vector<1x8x128xf32>
      %c0_22 = arith.constant 0 : index
      %c0_23 = arith.constant 0 : index
      %c0_24 = arith.constant 0 : index
      %64 = vector.load %arg5[%c0_22, %c0_23, %c0_24] : memref<1x8x128xf32, #tpu.memory_space<vmem>>, vector<1x8x128xf32>
      tpu.vector_store %arg5[%c0_22, %c0_23, %c0_24], %63 {strides = array<i32>} : memref<1x8x128xf32, #tpu.memory_space<vmem>>, vector<1x8x128xf32>,
    } else {
    }
    return
  }
  func.func @transform_0(%arg0: i32, %arg1: i32) -> (i32, i32) {
    %c1_i32 = arith.constant 1 : i32
    %0 = arith.muli %arg0, %c1_i32 : i32
    %1 = arith.addi %0, %arg1 : i32
    %c0_i32 = arith.constant 0 : i32
    %c0_i32_0 = arith.constant 0 : i32
    return %1, %c0_i32 : i32, i32
  }
  func.func @transform_1(%arg0: i32, %arg1: i32) -> (i32, i32) {
    %c1_i32 = arith.constant 1 : i32
    %0 = arith.muli %arg0, %c1_i32 : i32
    %1 = arith.addi %0, %arg1 : i32
    %c0_i32 = arith.constant 0 : i32
    %c0_i32_0 = arith.constant 0 : i32
    return %1, %c0_i32 : i32, i32
  }
  func.func @transform_2(%arg0: i32, %arg1: i32) -> (i32, i32) {
    %c0_i32 = arith.constant 0 : i32
    %c0_i32_0 = arith.constant 0 : i32
    %c0_i32_1 = arith.constant 0 : i32
    return %c0_i32, %c0_i32_0 : i32, i32
  }
  func.func @transform_3(%arg0: i32, %arg1: i32) -> (i32, i32, i32) {
    %c0_i32 = arith.constant 0 : i32
    %c0_i32_0 = arith.constant 0 : i32
    %c0_i32_1 = arith.constant 0 : i32
    return %arg0, %c0_i32, %c0_i32_0 : i32, i32, i32
  }
}

</mosaic_0001>

<llo_original>
// kernel: ssim_pallas.1
$region0: #{ssim_pallas.1}
  #allocation0 [shape = 'u32[]', space=smem, size = 0x4, offset = 0x4, fixed_abs, tag = 'smem constant byte address 0x4 - core index']
  #allocation1 [shape = 'u32[144,128]{1,0:T(1,128)}', space=vmem, size = 0x12000, scoped, tag = 'internal scratch']
  #allocation2 [shape = 'f32[8,256]{1,0:T(8,128)}', space=vmem, size = 0x2000, scoped, tag = 'scratch operand']
  %s0 = inlined_call_operand.vmem [shape: f32[8,256], index: 0, kind: input, shape index: {}]
  %s1 = inlined_call_operand.vmem [shape: f32[8,256], index: 1, kind: input, shape index: {}]
  %s2 = inlined_call_operand.vmem [shape: f32[256,256], index: 2, kind: input, shape index: {}]
  %s3 = inlined_call_operand.vmem [shape: f32[1,8,128], index: 3, kind: output, shape index: {}]
  %s4 = sld [smem:[#allocation0]]
  $region30: #{ssim_pallas.1} parent=0
    _
  %s6 = ssub.s32 1, %s4
  %s7 = scalar_select 0, %s6, %s4
  // Predicated region
  $region2: #{ssim_pallas.1} parent=0 // pred_check
    _
  $region3: #{ssim_pallas.1} parent=0 // pred_check_branch
    %9 = sbr.rel (0) target = $region5
  $region4: #{ssim_pallas.1} parent=0 // pred_region
    %s10 = sadd.s32 0, 0
    %p11 = scmp.lt.s32.totalorder %s10, 0
    %s12 = scalar_select %p11, %s10, 0
    %s13 = smul.addr %s12, 2
    %s14 = smul.addr %s13, 8
    %s15 = scalar_lea.vmem %s0, %s14
    %s16 = sadd.s32 0, 0
  $region5: #{ssim_pallas.1} parent=0 // pred_fallthru
    _
  // Predicated region
  $region6: #{ssim_pallas.1} parent=0 // pred_check
    _
  $region7: #{ssim_pallas.1} parent=0 // pred_check_branch
    %18 = sbr.rel (0) target = $region9
  $region8: #{ssim_pallas.1} parent=0 // pred_region
    %s19 = sadd.s32 0, 0
    %p20 = scmp.lt.s32.totalorder %s19, 0
    %s21 = scalar_select %p20, %s19, 0
    %s22 = smul.addr %s21, 2
    %s23 = smul.addr %s22, 8
    %s24 = scalar_lea.vmem %s1, %s23
    %s25 = sadd.s32 0, 0
  $region9: #{ssim_pallas.1} parent=0 // pred_fallthru
    _
  // Predicated region
  $region10: #{ssim_pallas.1} parent=0 // pred_check
    _
  $region11: #{ssim_pallas.1} parent=0 // pred_check_branch
    %27 = sbr.rel (0) target = $region13
  $region12: #{ssim_pallas.1} parent=0 // pred_region
    _
  $region13: #{ssim_pallas.1} parent=0 // pred_fallthru
    _
  %s28 = sadd.s32 0, 0
  %p29 = scmp.lt.s32.totalorder %s28, 0
  %s30 = scalar_select %p29, %s28, 0
  %s31 = smul.addr %s30, 2
  %s32 = smul.addr %s31, 8
  %s33 = scalar_lea.vmem %s0, %s32
  %s34 = sadd.s32 0, 0
  %p35 = scmp.lt.s32.totalorder %s34, 0
  %s36 = scalar_select %p35, %s34, 0
  %s37 = smul.addr %s36, 2
  %s38 = smul.addr %s37, 8
  %s39 = scalar_lea.vmem %s1, %s38
  %s40 = sadd.s32 0, 0
  %p41 = scmp.lt.s32.totalorder %s40, 0
  %s42 = scalar_select %p41, %s40, 0
  %s43 = smul.addr %s42, 2
  %s44 = smul.addr %s43, 8
  %s45 = scalar_lea.vmem %s0, %s44
  %s46 = sadd.s32 0, 0
  %s47 = sadd.s32 0, 0
  %p48 = scmp.lt.s32.totalorder %s47, 0
  %s49 = scalar_select %p48, %s47, 0
  %s50 = smul.addr %s49, 2
  %s51 = smul.addr %s50, 8
  %s52 = scalar_lea.vmem %s1, %s51
  %s53 = sadd.s32 0, 0
  %p54 = scmp.eq.s32.totalorder 0, 0
  // Predicated region
  $region14: #{ssim_pallas.1} parent=0 // pred_check
    %p55 = pneg %p54
  $region15: #{ssim_pallas.1} parent=0 // pred_check_branch
    %57 = sbr.rel (%p55) target = $region17
  $region16: #{ssim_pallas.1} parent=0 // pred_region
    %58 = vst [vmem:[#allocation2] sm:$0xff] 0.0
    %59 = vst [vmem:[#allocation2 + $0x8] sm:$0xff] 0.0
  $region17: #{ssim_pallas.1} parent=0 // pred_fallthru
    _
  %v60 = vld [vmem:[%s45] sm:$0xff]
  %v61 = vld [vmem:[%s45 + $0x8] sm:$0xff]
  %v62 = vld [vmem:[%s52] sm:$0xff]
  %v63 = vld [vmem:[%s52 + $0x8] sm:$0xff]
  %v64 = vld [vmem:[%s2] sm:$0xff]
  %v65 = vld [vmem:[%s2 + $0x8] sm:$0xff]
  %v66 = vld [vmem:[%s2 + $0x10] sm:$0xff]
  %v67 = vld [vmem:[%s2 + $0x18] sm:$0xff]
  %v68 = vld [vmem:[%s2 + $0x20] sm:$0xff]
  %v69 = vld [vmem:[%s2 + $0x28] sm:$0xff]
  %v70 = vld [vmem:[%s2 + $0x30] sm:$0xff]
  %v71 = vld [vmem:[%s2 + $0x38] sm:$0xff]
  %v72 = vld [vmem:[%s2 + $0x40] sm:$0xff]
  %v73 = vld [vmem:[%s2 + $0x48] sm:$0xff]
  %v74 = vld [vmem:[%s2 + $0x50] sm:$0xff]
  %v75 = vld [vmem:[%s2 + $0x58] sm:$0xff]
  %v76 = vld [vmem:[%s2 + $0x60] sm:$0xff]
  %v77 = vld [vmem:[%s2 + $0x68] sm:$0xff]
  %v78 = vld [vmem:[%s2 + $0x70] sm:$0xff]
  %v79 = vld [vmem:[%s2 + $0x78] sm:$0xff]
  %v80 = vld [vmem:[%s2 + $0x80] sm:$0xff]
  %v81 = vld [vmem:[%s2 + $0x88] sm:$0xff]
  %v82 = vld [vmem:[%s2 + $0x90] sm:$0xff]
  %v83 = vld [vmem:[%s2 + $0x98] sm:$0xff]
  %v84 = vld [vmem:[%s2 + $0xa0] sm:$0xff]
  %v85 = vld [vmem:[%s2 + $0xa8] sm:$0xff]
  %v86 = vld [vmem:[%s2 + $0xb0] sm:$0xff]
  %v87 = vld [vmem:[%s2 + $0xb8] sm:$0xff]
  %v88 = vld [vmem:[%s2 + $0xc0] sm:$0xff]
  %v89 = vld [vmem:[%s2 + $0xc8] sm:$0xff]
  %v90 = vld [vmem:[%s2 + $0xd0] sm:$0xff]
  %v91 = vld [vmem:[%s2 + $0xd8] sm:$0xff]
  %v92 = vld [vmem:[%s2 + $0xe0] sm:$0xff]
  %v93 = vld [vmem:[%s2 + $0xe8] sm:$0xff]
  %v94 = vld [vmem:[%s2 + $0xf0] sm:$0xff]
  %v95 = vld [vmem:[%s2 + $0xf8] sm:$0xff]
  %v96 = vld [vmem:[%s2 + $0x100] sm:$0xff]
  %v97 = vld [vmem:[%s2 + $0x108] sm:$0xff]
  %v98 = vld [vmem:[%s2 + $0x110] sm:$0xff]
  %v99 = vld [vmem:[%s2 + $0x118] sm:$0xff]
  %v100 = vld [vmem:[%s2 + $0x120] sm:$0xff]
  %v101 = vld [vmem:[%s2 + $0x128] sm:$0xff]
  %v102 = vld [vmem:[%s2 + $0x130] sm:$0xff]
  %v103 = vld [vmem:[%s2 + $0x138] sm:$0xff]
  %v104 = vld [vmem:[%s2 + $0x140] sm:$0xff]
  %v105 = vld [vmem:[%s2 + $0x148] sm:$0xff]
  %v106 = vld [vmem:[%s2 + $0x150] sm:$0xff]
  %v107 = vld [vmem:[%s2 + $0x158] sm:$0xff]
  %v108 = vld [vmem:[%s2 + $0x160] sm:$0xff]
  %v109 = vld [vmem:[%s2 + $0x168] sm:$0xff]
  %v110 = vld [vmem:[%s2 + $0x170] sm:$0xff]
  %v111 = vld [vmem:[%s2 + $0x178] sm:$0xff]
  %v112 = vld [vmem:[%s2 + $0x180] sm:$0xff]
  %v113 = vld [vmem:[%s2 + $0x188] sm:$0xff]
  %v114 = vld [vmem:[%s2 + $0x190] sm:$0xff]
  %v115 = vld [vmem:[%s2 + $0x198] sm:$0xff]
  %v116 = vld [vmem:[%s2 + $0x1a0] sm:$0xff]
  %v117 = vld [vmem:[%s2 + $0x1a8] sm:$0xff]
  %v118 = vld [vmem:[%s2 + $0x1b0] sm:$0xff]
  %v119 = vld [vmem:[%s2 + $0x1b8] sm:$0xff]
  %v120 = vld [vmem:[%s2 + $0x1c0] sm:$0xff]
  %v121 = vld [vmem:[%s2 + $0x1c8] sm:$0xff]
  %v122 = vld [vmem:[%s2 + $0x1d0] sm:$0xff]
  %v123 = vld [vmem:[%s2 + $0x1d8] sm:$0xff]
  %v124 = vld [vmem:[%s2 + $0x1e0] sm:$0xff]
  %v125 = vld [vmem:[%s2 + $0x1e8] sm:$0xff]
  %v126 = vld [vmem:[%s2 + $0x1f0] sm:$0xff]
  %v127 = vld [vmem:[%s2 + $0x1f8] sm:$0xff]
  %v128 = vmul.f32 %v60, %v60
  %v129 = vmul.f32 %v61, %v61
  %v130 = vmul.f32 %v62, %v62
  %v131 = vmul.f32 %v63, %v63
  %v132 = vmul.f32 %v60, %v62
  %v133 = vmul.f32 %v61, %v63
  %134 = vmatprep.subr.mxu0 %v65
  %135 = vmatpush1.msra.mxu0 %v64
  %136 = vmatprep.subr.mxu0 %v67
  %137 = vmatpush1.msra.mxu0 %v66
  %138 = vmatprep.subr.mxu0 %v69
  %139 = vmatpush1.msra.mxu0 %v68
  %140 = vmatprep.subr.mxu0 %v71
  %141 = vmatpush1.msra.mxu0 %v70
  %142 = vmatprep.subr.mxu0 %v73
  %143 = vmatpush1.msra.mxu0 %v72
  %144 = vmatprep.subr.mxu0 %v75
  %145 = vmatpush1.msra.mxu0 %v74
  %146 = vmatprep.subr.mxu0 %v77
  %147 = vmatpush1.msra.mxu0 %v76
  %148 = vmatprep.subr.mxu0 %v79
  %149 = vmatpush1.msra.mxu0 %v78
  %150 = vmatprep.subr.mxu0 %v81
  %151 = vmatpush1.msra.mxu0 %v80
  %152 = vmatprep.subr.mxu0 %v83
  %153 = vmatpush1.msra.mxu0 %v82
  %154 = vmatprep.subr.mxu0 %v85
  %155 = vmatpush1.msra.mxu0 %v84
  %156 = vmatprep.subr.mxu0 %v87
  %157 = vmatpush1.msra.mxu0 %v86
  %158 = vmatprep.subr.mxu0 %v89
  %159 = vmatpush1.msra.mxu0 %v88
  %160 = vmatprep.subr.mxu0 %v91
  %161 = vmatpush1.msra.mxu0 %v90
  %162 = vmatprep.subr.mxu0 %v93
  %163 = vmatpush1.msra.mxu0 %v92
  %164 = vmatprep.subr.mxu0 %v95
  %165 = vmatpush1.msra.mxu0 %v94
  %166 = vmatprep.subr.mxu0 %v97
  %167 = vmatpush1.msra.mxu0 %v96
  %168 = vmatprep.subr.mxu0 %v99
  %169 = vmatpush1.msra.mxu0 %v98
  %170 = vmatprep.subr.mxu0 %v101
  %171 = vmatpush1.msra.mxu0 %v100
  %172 = vmatprep.subr.mxu0 %v103
  %173 = vmatpush1.msra.mxu0 %v102
  %174 = vmatprep.subr.mxu0 %v105
  %175 = vmatpush1.msra.mxu0 %v104
  %176 = vmatprep.subr.mxu0 %v107
  %177 = vmatpush1.msra.mxu0 %v106
  %178 = vmatprep.subr.mxu0 %v109
  %179 = vmatpush1.msra.mxu0 %v108
  %180 = vmatprep.subr.mxu0 %v111
  %181 = vmatpush1.msra.mxu0 %v110
  %182 = vmatprep.subr.mxu0 %v113
  %183 = vmatpush1.msra.mxu0 %v112
  %184 = vmatprep.subr.mxu0 %v115
  %185 = vmatpush1.msra.mxu0 %v114
  %186 = vmatprep.subr.mxu0 %v117
  %187 = vmatpush1.msra.mxu0 %v116
  %188 = vmatprep.subr.mxu0 %v119
  %189 = vmatpush1.msra.mxu0 %v118
  %190 = vmatprep.subr.mxu0 %v121
  %191 = vmatpush1.msra.mxu0 %v120
  %192 = vmatprep.subr.mxu0 %v123
  %193 = vmatpush1.msra.mxu0 %v122
  %194 = vmatprep.subr.mxu0 %v125
  %195 = vmatpush1.msra.mxu0 %v124
  %196 = vmatprep.subr.mxu0 %v127
  %197 = vmatpush1.msra.mxu0 %v126
  %198 = vmatprep.mubr.f32.mxu0 %v61
  %199 = vmatmul.mubr.f32.gmra.mrb[0].mxu0 %v60
  %v200 = vpop.f32.mrb[0].mxu0
  %v201 = vadd.f32 0.0, %v200
  %v202 = vpop.f32.mrb[0].mxu0
  %v203 = vadd.f32 0.0, %v202
  %204 = vmatprep.mubr.f32.mxu0 %v63
  %205 = vmatmul.mubr.f32.gmra.mrb[0].mxu0 %v62
  %v206 = vpop.f32.mrb[0].mxu0
  %v207 = vadd.f32 0.0, %v206
  %v208 = vpop.f32.mrb[0].mxu0
  %v209 = vadd.f32 0.0, %v208
  %210 = vmatprep.mubr.f32.mxu0 %v129
  %211 = vmatmul.mubr.f32.gmra.mrb[0].mxu0 %v128
  %v212 = vpop.f32.mrb[0].mxu0
  %v213 = vadd.f32 0.0, %v212
  %v214 = vpop.f32.mrb[0].mxu0
  %v215 = vadd.f32 0.0, %v214
  %216 = vmatprep.mubr.f32.mxu0 %v131
  %217 = vmatmul.mubr.f32.gmra.mrb[0].mxu0 %v130
  %v218 = vpop.f32.mrb[0].mxu0
  %v219 = vadd.f32 0.0, %v218
  %v220 = vpop.f32.mrb[0].mxu0
  %v221 = vadd.f32 0.0, %v220
  %222 = vmatprep.mubr.f32.mxu0 %v133
  %223 = vmatmul.mubr.f32.gmra.mrb[0].mxu0 %v132
  %v224 = vpop.f32.mrb[0].mxu0
  %v225 = vadd.f32 0.0, %v224
  %v226 = vpop.f32.mrb[0].mxu0
  %v227 = vadd.f32 0.0, %v226
  %228 = vdwg.mxu0
  %v229 = vmul.f32 %v201, %v201
  %v230 = vmul.f32 %v203, %v203
  %v231 = vmul.f32 %v207, %v207
  %v232 = vmul.f32 %v209, %v209
  %v233 = vmul.f32 %v201, %v207
  %v234 = vmul.f32 %v203, %v209
  %v235 = vsub.f32 %v213, %v229
  %v236 = vsub.f32 %v215, %v230
  %v237 = vsub.f32 %v219, %v231
  %v238 = vsub.f32 %v221, %v232
  %v239 = vsub.f32 %v225, %v233
  %v240 = vsub.f32 %v227, %v234
  %v241 = vmul.f32 %v233, 2.0
  %v242 = vmul.f32 %v234, 2.0
  %v243 = vadd.f32 %v241, 0.0001
  %v244 = vadd.f32 %v242, 0.0001
  %v245 = vmul.f32 %v239, 2.0
  %v246 = vmul.f32 %v240, 2.0
  %v247 = vadd.f32 %v245, 0.0009
  %v248 = vadd.f32 %v246, 0.0009
  %v249 = vmul.f32 %v243, %v247
  %v250 = vmul.f32 %v244, %v248
  %v251 = vadd.f32 %v229, %v231
  %v252 = vadd.f32 %v230, %v232
  %v253 = vadd.f32 %v251, 0.0001
  %v254 = vadd.f32 %v252, 0.0001
  %v255 = vadd.f32 %v235, %v237
  %v256 = vadd.f32 %v236, %v238
  %v257 = vadd.f32 %v255, 0.0009
  %v258 = vadd.f32 %v256, 0.0009
  %v259 = vmul.f32 %v253, %v257
  %v260 = vmul.f32 %v254, %v258
  %v261 = vrcp.pop %v259
  %v262 = vrcp.pop %v260
  %v263 = vmul.f32 %v249, %v261
  %v264 = vmul.f32 %v250, %v262
  %s265 = sadd.s32 0, 0
  %s266 = smul.u32 %s265, 8
  %v267 = vlaneseq
  %v268 = vshrl.u32 %v267, 7
  %v269 = vstv %s266
  %v270 = vadd.s32 %v268, %v269
  %v271 = vld [vmem:[#allocation2] sm:$0xff]
  %v272 = vld [vmem:[#allocation2 + $0x8] sm:$0xff]
  %vm273 = vcmp.lt.s32.totalorder %v270, 6
  %v274 = vsel %vm273, 1, 0
  %vm275 = vcmp.eq.s32.totalorder %v274, 1
  %v276 = vsel %vm275, %v263, 0.0
  %v277 = vsel %vm275, %v264, 0.0
  %v278 = vadd.f32 %v271, %v276
  %v279 = vadd.f32 %v272, %v277
  %280 = vst [vmem:[#allocation2] sm:$0xff] %v278
  %281 = vst [vmem:[#allocation2 + $0x8] sm:$0xff] %v279
  // Predicated region
  $region18: #{ssim_pallas.1} parent=0 // pred_check
    %p282 = pneg %p54
  $region19: #{ssim_pallas.1} parent=0 // pred_check_branch
    %284 = sbr.rel (%p282) target = $region21
  $region20: #{ssim_pallas.1} parent=0 // pred_region
    %v285 = vld [vmem:[#allocation2] sm:$0xff]
    %v286 = vld [vmem:[#allocation2 + $0x8] sm:$0xff]
    %v287 = vadd.f32 %v285, %v286
    %288 = vadd.xlane.f32.xlu0 %v287
    %v289 = vpop.xlane.xlu0 %288
    %v290 = vrot.slane %v289, 4
    %v291 = vadd.f32 %v289, %v290
    %v292 = vrot.slane %v291, 2
    %v293 = vadd.f32 %v291, %v292
    %v294 = vrot.slane %v293, 1
    %v295 = vadd.f32 %v293, %v294
    %s296 = vtos %v295
    %v297 = vstv %s296
    %298 = vst [vmem:[%s3] sm:$0xff] %v297
  $region21: #{ssim_pallas.1} parent=0 // pred_fallthru
    _
  // Predicated region
  $region22: #{ssim_pallas.1} parent=0 // pred_check
    _
  $region23: #{ssim_pallas.1} parent=0 // pred_check_branch
    %300 = sbr.rel (0) target = $region25
  $region24: #{ssim_pallas.1} parent=0 // pred_region
    _
  $region25: #{ssim_pallas.1} parent=0 // pred_fallthru
    _
  // Predicated region
  $region26: #{ssim_pallas.1} parent=0 // pred_check
    _
  $region27: #{ssim_pallas.1} parent=0 // pred_check_branch
    %302 = sbr.rel (0) target = $region29
  $region28: #{ssim_pallas.1} parent=0 // pred_region
    _
  $region29: #{ssim_pallas.1} parent=0 // pred_fallthru
    _

</llo_original>
